<compile_context>
chip_gen: v7x
topology: tpu7x:2x2x1
jax: 0.10.0
libtpu: 0.0.40
codegen_flags: <defaults>
</compile_context>

<pallas_src>
import math
import functools

import jax
import jax.numpy as jnp
from jax.experimental import pallas as pl
from jax.experimental.pallas import tpu as pltpu


# --------------------------------------------------------------------------- #
# Plain-JAX construction of the sinusoidal table (parameter setup / glue).
# --------------------------------------------------------------------------- #
def get_embedding(num_embeddings: int, embedding_dim: int, padding_idx=None) -> jnp.ndarray:
    half_dim = embedding_dim // 2
    denom = max(half_dim - 1, 1)            # guard D == 2 (fairseq divides by zero here)
    emb = math.log(10000.0) / denom
    emb = jnp.exp(jnp.arange(half_dim, dtype=jnp.float32) * -emb)
    emb = jnp.arange(num_embeddings, dtype=jnp.float32)[:, None] * emb[None, :]
    emb = jnp.concatenate([jnp.sin(emb), jnp.cos(emb)], axis=1).reshape(num_embeddings, -1)
    if embedding_dim % 2 == 1:
        emb = jnp.concatenate([emb, jnp.zeros((num_embeddings, 1), jnp.float32)], axis=1)
    if padding_idx is not None:
        emb = emb.at[padding_idx, :].set(0.0)
    return emb


# Cached derived tables -- built once per (shape, padding_idx) like a registered buffer.
@functools.lru_cache(maxsize=None)
def _base_table(num_rows: int, D: int, padding_idx: int) -> jnp.ndarray:
    return get_embedding(num_rows, D, padding_idx)


@functools.lru_cache(maxsize=None)
def _right_flat_table(S_pad: int, D: int, padding_idx: int, L: int) -> jnp.ndarray:
    w = _base_table(padding_idx + 1 + S_pad, D, padding_idx)
    return w[padding_idx + 1:].reshape(-1, L)            # (S_pad*D//L, L), free reshape


@functools.lru_cache(maxsize=None)
def _right_tiled_table(S_pad: int, D: int, padding_idx: int) -> jnp.ndarray:
    w = _base_table(padding_idx + 1 + S_pad, D, padding_idx)
    return w[padding_idx + 1:]                            # (S_pad, D)


@functools.lru_cache(maxsize=None)
def _left_table(S_pad: int, D: int, padding_idx: int) -> jnp.ndarray:
    # S_pad zero rows in front (keeps the data-dependent start >= 0) + table + 8 spare
    # zero rows at the end (safety margin against the exactly-at-the-edge max index).
    w = _base_table(padding_idx + 1 + S_pad, D, padding_idx)
    return jnp.concatenate(
        [jnp.zeros((S_pad, D), jnp.float32), w, jnp.zeros((8, D), jnp.float32)], axis=0)


# --------------------------------------------------------------------------- #
# Kernels
# --------------------------------------------------------------------------- #
def _kernel_right_flat(nnp_ref, w_ref, out_ref, *, tile_s: int, D: int, L: int):
    # nnp_ref: (B,) int32 in SMEM (scalar prefetch) -- per-row non-pad counts.
    # w_ref  : (R, L) f32 lane-dense slab = weights[pi+1 + si*tile_s : +tile_s] flattened.
    # out_ref: (R, L) f32 lane-dense output block for (batch b, S-tile si).
    si = pl.program_id(0)
    b = pl.program_id(1)
    nnp = nnp_ref[b]
    R = (tile_s * D) // L
    r = jax.lax.broadcasted_iota(jnp.int32, (R, L), 0)
    c = jax.lax.broadcasted_iota(jnp.int32, (R, L), 1)
    flat = r * L + c                         # flat element index within the (tile_s, D) tile
    # flat // D < (nnp - si*tile_s)  <=>  flat < (nnp - si*tile_s) * D   (no integer div)
    thresh = (nnp - si * tile_s) * D
    out_ref[...] = jnp.where(flat < thresh, w_ref[...], 0.0)


def _kernel_right_tiled(nnp_ref, w_ref, out_ref, *, tile_s: int, D: int):
    # Fallback when no lane-dense factorization exists (odd/small D).
    # w_ref: (tile_s, D) ; out_ref: (tile_s, D) (leading batch dim squeezed).
    si = pl.program_id(0)
    b = pl.program_id(1)
    nnp = nnp_ref[b]
    col = si * tile_s + jax.lax.broadcasted_iota(jnp.int32, (tile_s, D), 0)
    out_ref[...] = jnp.where(col < nnp, w_ref[...], 0.0)


def _kernel_left(nnp_ref, wpad_ref, out_ref, *, tile_s: int, D: int,
                 S: int, S_pad: int, padding_idx: int):
    # wpad_ref: full zero-padded table, grid-invariant (resident in VMEM).
    # out_ref : (tile_s, D) output block for (batch b, S-tile si).
    si = pl.program_id(0)
    b = pl.program_id(1)
    nnp = nnp_ref[b]
    start = (S_pad - S) + padding_idx + 1 + nnp + si * tile_s
    slab = wpad_ref[pl.ds(start, tile_s), :]                       # (tile_s, D)
    col = si * tile_s + jax.lax.broadcasted_iota(jnp.int32, (tile_s, D), 0)
    out_ref[...] = jnp.where(col >= (S - nnp), slab, 0.0)


# --------------------------------------------------------------------------- #
# Tiling / capacity helpers
# --------------------------------------------------------------------------- #
def _vmem_capacity_bytes() -> int:
    try:
        cap = getattr(pltpu.get_tpu_info(), "vmem_capacity_bytes", None)
        if cap:
            return int(cap)
    except Exception:
        pass
    return 64 * 1024 * 1024        # conservative (v7x physical); safe everywhere


def _pick_tile_s(S_pad: int, D: int, resident_bytes: int, budget_bytes: int) -> int:
    # Largest multiple of 128 dividing S_pad such that the double-buffered blocks fit
    # the VMEM budget; cap each output buffer around 4 MiB (measured sweet spot).
    best = 128
    for t in range(128, S_pad + 1, 128):
        if S_pad % t != 0:
            continue
        per_step = 4 * t * D * 4          # 2x out buffers + 2x weight-tile buffers, f32
        if resident_bytes + per_step <= budget_bytes and t * D * 4 <= (4 << 20):
            best = t
    return best


def _pick_flat_cols(tile_elems: int, cap: int = 2048):
    # Largest L (multiple of 128, <= cap) such that 8*L divides tile_elems, giving a
    # fully dense (R>=8 sublanes, L lanes) block.  None -> use the non-flat fallback.
    L = min(cap, tile_elems // 8)
    L -= L % 128
    while L >= 128:
        if tile_elems % (8 * L) == 0:
            return L
        L -= 128
    return None


# --------------------------------------------------------------------------- #
# Wrapper
# --------------------------------------------------------------------------- #
def sinusoidal_positional_embedding(tokens: jnp.ndarray,
                                    embedding_dim: int,
                                    padding_idx: int,
                                    left_pad: bool) -> jnp.ndarray:
    """Forward pass of SinusoidalPositionalEmbedding (incremental_state=None)."""
    tokens = tokens.astype(jnp.int32)
    B, S = tokens.shape
    D = int(embedding_dim)
    S_pad = ((S + 127) // 128) * 128                      # keep the pipeline (never 1 odd tile)

    # Per-row non-pad counts (tiny XLA reduce); drives both the mask and the left shift.
    n_nonpad = jnp.sum((tokens != padding_idx).astype(jnp.int32), axis=1)

    # VMEM budgeting: explicit scoped limit (v5e default 16 MiB would reject big tiles),
    # tile sizing against a fraction of it (v7x has only 64 MiB physical).
    vmem_limit = int((_vmem_capacity_bytes() * 3) // 4)
    budget = int(vmem_limit * 0.6)

    if left_pad:
        wpad = _left_table(S_pad, D, padding_idx)         # (2*S_pad + pi + 9, D)
        resident_bytes = 2 * wpad.shape[0] * D * 4        # conservative: count 2 buffers
    else:
        resident_bytes = 0

    tile_s = _pick_tile_s(S_pad, D, resident_bytes, budget)
    n_tiles = S_pad // tile_s
    grid = (n_tiles, B)                                   # b innermost -> weight tile reused
    cparams = pltpu.CompilerParams(
        dimension_semantics=("parallel", "parallel"),
        vmem_limit_bytes=vmem_limit,
    )

    if not left_pad:
        L = _pick_flat_cols(tile_s * D)
        if L is not None:
            # Lane-dense path: output viewed as (B*S_pad*D//L, L), unmasked full-vreg stores.
            R = (tile_s * D) // L
            wflat = _right_flat_table(S_pad, D, padding_idx, L)
            kernel = functools.partial(_kernel_right_flat, tile_s=tile_s, D=D, L=L)
            out_flat = pl.pallas_call(
                kernel,
                out_shape=jax.ShapeDtypeStruct((B * S_pad * D // L, L), jnp.float32),
                grid_spec=pltpu.PrefetchScalarGridSpec(
                    num_scalar_prefetch=1,
                    grid=grid,
                    in_specs=[pl.BlockSpec((R, L), lambda si, b, nnp: (si, 0))],
                    out_specs=pl.BlockSpec(
                        (R, L), lambda si, b, nnp: (b * n_tiles + si, 0)),
                ),
                compiler_params=cparams,
            )(n_nonpad, wflat)
            out = out_flat.reshape(B, S_pad, D)
        else:
            # Fallback: natural (tile_s, D) blocks (D odd / too small to flatten cleanly).
            wslice = _right_tiled_table(S_pad, D, padding_idx)
            kernel = functools.partial(_kernel_right_tiled, tile_s=tile_s, D=D)
            out = pl.pallas_call(
                kernel,
                out_shape=jax.ShapeDtypeStruct((B, S_pad, D), jnp.float32),
                grid_spec=pltpu.PrefetchScalarGridSpec(
                    num_scalar_prefetch=1,
                    grid=grid,
                    in_specs=[pl.BlockSpec((tile_s, D), lambda si, b, nnp: (si, 0))],
                    out_specs=pl.BlockSpec((None, tile_s, D),
                                           lambda si, b, nnp: (b, si, 0)),
                ),
                compiler_params=cparams,
            )(n_nonpad, wslice)
    else:
        rows = wpad.shape[0]
        kernel = functools.partial(_kernel_left, tile_s=tile_s, D=D, S=S, S_pad=S_pad,
                                   padding_idx=padding_idx)
        out = pl.pallas_call(
            kernel,
            out_shape=jax.ShapeDtypeStruct((B, S_pad, D), jnp.float32),
            grid_spec=pltpu.PrefetchScalarGridSpec(
                num_scalar_prefetch=1,
                grid=grid,
                in_specs=[
                    # Full padded table, grid-invariant -> DMA'd once, resident in VMEM.
                    pl.BlockSpec((rows, D), lambda si, b, nnp: (0, 0)),
                ],
                out_specs=pl.BlockSpec((None, tile_s, D), lambda si, b, nnp: (b, si, 0)),
            ),
            compiler_params=cparams,
        )(n_nonpad, wpad)

    if S_pad != S:
        out = out[:, :S, :]
    return out


# --------------------------------------------------------------------------- #
# Pure-JAX reference replicating the PyTorch semantics (contiguous padding).
# --------------------------------------------------------------------------- #
def _reference(tokens, embedding_dim, padding_idx, left_pad):
    B, S = tokens.shape
    num_emb = padding_idx + 1 + S
    weights = get_embedding(num_emb, embedding_dim, padding_idx)
    mask = tokens != padding_idx
    pos = jnp.arange(S, dtype=jnp.int32)[None, :] + (padding_idx + 1)
    pos = jnp.broadcast_to(pos, (B, S))
    if left_pad:
        pos = pos - S + jnp.sum(mask.astype(jnp.int32), axis=1, keepdims=True)
    pos = jnp.where(mask, pos, padding_idx)
    return weights[pos.reshape(-1)].reshape(B, S, embedding_dim)


if __name__ == "__main__":
    padding_idx = 1
    # small, multi-tile, and a non-128-multiple S with odd-flattening D (fallback path)
    cases = [(2, 8, 32), (2, 1024, 32), (2, 200, 6)]
    for (B, S, D) in cases:
        key = jax.random.PRNGKey(0)
        toks0 = jax.random.randint(key, (B, S), minval=2, maxval=100, dtype=jnp.int32)
        for left_pad in (False, True):
            toks = toks0
            if left_pad:     # contiguous pads on the left
                toks = toks.at[0, :3].set(padding_idx)
                toks = toks.at[1, :1].set(padding_idx)
            else:            # contiguous pads on the right
                toks = toks.at[0, S - 3:].set(padding_idx)
                toks = toks.at[1, S - 1:].set(padding_idx)

            out = sinusoidal_positional_embedding(toks, D, padding_idx, left_pad)
            out = jax.block_until_ready(out)
            ref = _reference(toks, D, padding_idx, left_pad)

            assert out.shape == (B, S, D), out.shape
            assert out.dtype == jnp.float32, out.dtype
            err = float(jnp.max(jnp.abs(out - ref)))
            assert err <= 1e-5, (B, S, D, left_pad, err)

    print("KERNEL_OK")
</pallas_src>

<mosaic_0001>
module attributes {stable_mosaic.version = 11 : i64} {
  func.func @_kernel_right_flat(%arg0: i32, %arg1: i32, %arg2: memref<2xi32, #tpu.memory_space<smem>>, %arg3: memref<8x512xf32, #tpu.memory_space<vmem>>, %arg4: memref<8x512xf32, #tpu.memory_space<vmem>>) attributes {dimension_semantics = [#tpu.dimension_semantics<parallel>, #tpu.dimension_semantics<parallel>], iteration_bounds = array<i64: 1, 2>, scalar_prefetch = 1 : i64, scratch_operands = 0 : i64, tpu.core_type = #tpu.core_type<tc>, window_params = [{transform_indices = @transform_0, window_bounds = array<i64: 8, 512>}, {transform_indices = @transform_1, window_bounds = array<i64: 8, 512>}]} {
    %0 = arith.index_cast %arg1 : i32 to index
    %1 = memref.load %arg2[%0] : memref<2xi32, #tpu.memory_space<smem>>
    %2 = tpu.iota {dimensions = array<i32: 0>} : vector<8x512xi32>
    %3 = tpu.iota {dimensions = array<i32: 1>} : vector<8x512xi32>
    %c512_i32 = arith.constant 512 : i32
    %4 = vector.broadcast %c512_i32 : i32 to vector<8x512xi32>
    %5 = arith.muli %2, %4 : vector<8x512xi32>
    %6 = arith.addi %5, %3 : vector<8x512xi32>
    %c128_i32 = arith.constant 128 : i32
    %7 = arith.muli %arg0, %c128_i32 : i32
    %8 = arith.subi %1, %7 : i32
    %c32_i32 = arith.constant 32 : i32
    %9 = arith.muli %8, %c32_i32 : i32
    %10 = vector.broadcast %9 : i32 to vector<8x512xi32>
    %11 = arith.cmpi slt, %6, %10 : vector<8x512xi32>
    %c0 = arith.constant 0 : index
    %c0_0 = arith.constant 0 : index
    %12 = vector.load %arg3[%c0, %c0_0] : memref<8x512xf32, #tpu.memory_space<vmem>>, vector<8x512xf32>
    %cst = arith.constant 0.000000e+00 : f32
    %13 = vector.broadcast %cst : f32 to vector<8x512xf32>
    %14 = arith.select %11, %12, %13 : vector<8x512xi1>, vector<8x512xf32>
    %c0_1 = arith.constant 0 : index
    %c0_2 = arith.constant 0 : index
    %15 = vector.load %arg4[%c0_1, %c0_2] : memref<8x512xf32, #tpu.memory_space<vmem>>, vector<8x512xf32>
    tpu.vector_store %arg4[%c0_1, %c0_2], %14 {strides = array<i32>} : memref<8x512xf32, #tpu.memory_space<vmem>>, vector<8x512xf32>,
    return
  }
  func.func @transform_0(%arg0: i32, %arg1: i32, %arg2: memref<2xi32, #tpu.memory_space<smem>>) -> (i32, i32) {
    %c0_i32 = arith.constant 0 : i32
    %c0_i32_0 = arith.constant 0 : i32
    return %arg0, %c0_i32 : i32, i32
  }
  func.func @transform_1(%arg0: i32, %arg1: i32, %arg2: memref<2xi32, #tpu.memory_space<smem>>) -> (i32, i32) {
    %c1_i32 = arith.constant 1 : i32
    %0 = arith.muli %arg1, %c1_i32 : i32
    %1 = arith.addi %0, %arg0 : i32
    %c0_i32 = arith.constant 0 : i32
    %c0_i32_0 = arith.constant 0 : i32
    return %1, %c0_i32 : i32, i32
  }
}

</mosaic_0001>

<llo_original>
// kernel: tpu_custom_call.1
$region0: #{tpu_custom_call.1}
  #allocation0 [shape = 'u32[]', space=smem, size = 0x4, offset = 0x4, fixed_abs, tag = 'smem constant byte address 0x4 - core index']
  #allocation1 [shape = 'u32[144,128]{1,0:T(1,128)}', space=vmem, size = 0x12000, scoped, tag = 'internal scratch']
  #allocation2 [shape = 's32[1]{0}', space=sflag, size = 0x4, scoped, tag = 'scoped memory for tpu_custom_call.1']
  #allocation3 [shape = 'u8[512]{0}', space=smem, size = 0x200, scoped, tag = 'prefetched SMEM operand 0']
  %s0 = inlined_call_operand.hbm [shape: s32[2], index: 0, kind: input, shape index: {}]
  %s1 = inlined_call_operand.hbm [shape: f32[8,512], index: 1, kind: input, shape index: {}]
  %s2 = inlined_call_operand.hbm [shape: f32[16,512], index: 2, kind: output, shape index: {}]
  %s3 = sld [smem:[#allocation0]]
  $region41: #{tpu_custom_call.1} parent=0
    _
  %s5 = ssub.s32 1, %s3
  %s6 = scalar_select 0, %s5, %s3
  %8 = dma.hbm_to_smem %s0, 16, [#allocation3], [#allocation2]
  %9 = dma.done [#allocation2], 16
  %10 = sfence
  $region1: #{tpu_custom_call.1} parent=0
    #allocation4 [shape = 'u8[16384]{0}', space=vmem, size = 0x4000, scoped, tag = 'input window, operand 1, single buffered']
    #allocation5 [shape = 's32[2]{0}', space=sflag, size = 0x8, scoped, tag = 'scoped memory for tpu_custom_call.1']
    #allocation6 [shape = 's32[2]{0}', space=sflag, size = 0x8, scoped, tag = 'scoped memory for tpu_custom_call.1']
    #allocation7 [shape = 'u8[32768]{0}', space=vmem, size = 0x8000, scoped, tag = 'output window, operand 0']
    %11 = vsyncpa [#allocation5], 0
    %12 = vsyncpa [#allocation6], 0
    %s13 = scalar_lea.sflag [#allocation6], 1
    %14 = vsyncpa %s13, 0
    loop: start=0, step=1, limit=4
    $region2: #{tpu_custom_call.1} parent=1 // loop_pre_header
      _
    $region3: #{tpu_custom_call.1} parent=1 // loop_header
      %s16 = sphi 0, %s20
      %p17 = scmp.ge.s32.totalorder %s16, 4
      %s23 = sphi 0, %s35
      %s24 = sphi 0, %s31
      %s25 = sphi 0, %s23
      %s26 = sphi 0, %s24
      %s27 = sphi 0, %s25
      %s28 = sphi 0, %s26
      %s38 = sphi 0, %s40
      %s41 = sphi 0, %s38
      %s42 = sphi 0, %s41
      %s58 = sphi 0, %s42
      %s66 = sphi 0, %s68
      %s69 = sphi 0, %s66
      %s70 = sphi 0, %s69
      %s86 = sphi 0, %s70
    $region4: #{tpu_custom_call.1} parent=1 // loop_header_branch
      %19 = sbr.rel (%p17) target = $region8
    $region5: #{tpu_custom_call.1} parent=1 // loop_body
      %s21 = ssub.s32 %s16, 1
      %s22 = ssub.s32 %s16, 2
      %s29 = sadd.s32 1, %s24
      %p30 = scmp.ge.s32.totalorder %s29, 2
      %s31 = scalar_select %p30, 0, %s29
      %s32 = sadd.s32 1, %s23
      %s33 = scalar_select %p30, %s32, %s23
      %p34 = scmp.ge.s32.totalorder %s33, 1
      %s35 = scalar_select %p34, 0, %s33
      %s36 = ssub.s32 %s23, %s35
      %p37 = scmp.eq.s32.totalorder %s36, 0
      %s39 = sadd.s32 %s38, 1
      %s40 = scalar_select %p37, %s38, %s39
      %p43 = pneg %p37
      %p44 = scmp.eq.s32.totalorder %s16, 1
      %p45 = por %p43, %p44
      %p46 = scmp.ne.s32.totalorder %s38, %s41
      %p47 = scmp.eq.s32.totalorder %s16, 0
      %p48 = por %p46, %p47
      %p49 = scmp.ne.s32.totalorder %s38, %s41
      %p50 = scmp.eq.s32.totalorder %s21, 1
      %p51 = por %p49, %p50
      %p52 = scmp.ne.s32.totalorder %s41, %s42
      %p53 = scmp.eq.s32.totalorder %s21, 0
      %p54 = por %p52, %p53
      %p55 = scmp.ne.s32.totalorder %s41, %s42
      %p56 = scmp.eq.s32.totalorder %s22, 1
      %p57 = por %p55, %p56
      %p59 = scmp.ne.s32.totalorder %s42, %s58
      %p60 = scmp.eq.s32.totalorder %s22, 0
      %p61 = por %p59, %p60
      %s62 = sadd.s32 %s24, %s23
      %s63 = sadd.s32 %s31, %s35
      %s64 = ssub.s32 %s62, %s63
      %p65 = scmp.eq.s32.totalorder %s64, 0
      %s67 = sadd.s32 %s66, 1
      %s68 = scalar_select %p65, %s66, %s67
      %p71 = pneg %p65
      %p72 = scmp.eq.s32.totalorder %s16, 1
      %p73 = por %p71, %p72
      %p74 = scmp.ne.s32.totalorder %s66, %s69
      %p75 = scmp.eq.s32.totalorder %s16, 0
      %p76 = por %p74, %p75
      %p77 = scmp.ne.s32.totalorder %s66, %s69
      %p78 = scmp.eq.s32.totalorder %s21, 1
      %p79 = por %p77, %p78
      %p80 = scmp.ne.s32.totalorder %s69, %s70
      %p81 = scmp.eq.s32.totalorder %s21, 0
      %p82 = por %p80, %p81
      %p83 = scmp.ne.s32.totalorder %s69, %s70
      %p84 = scmp.eq.s32.totalorder %s22, 1
      %p85 = por %p83, %p84
      %p87 = scmp.ne.s32.totalorder %s70, %s86
      %p88 = scmp.eq.s32.totalorder %s22, 0
      %p89 = por %p87, %p88
      %p90 = scmp.le.s32.totalorder 1, %s16
      %p91 = scmp.lt.s32.totalorder %s16, 3
      %p92 = pnand %p90, %p91
      %p93 = pneg %p92
      // Predicated region
      $region9: #{tpu_custom_call.1} parent=5 // pred_check
        _
      $region10: #{tpu_custom_call.1} parent=5 // pred_check_branch
        %95 = sbr.rel (%p92) target = $region12
      $region11: #{tpu_custom_call.1} parent=5 // pred_region
        %s96 = ssub.s32 %s16, 1
        // Predicated region
        $region13: #{tpu_custom_call.1} parent=11 // pred_check
          %p97 = pneg %p54
        $region14: #{tpu_custom_call.1} parent=11 // pred_check_branch
          %99 = sbr.rel (%p97) target = $region16
        $region15: #{tpu_custom_call.1} parent=11 // pred_region
          %s101 = ssub.s32 512, 512
          %102 = vsyncadd [#allocation5], %s101
          %s103 = smul.addr %s25, 4
          %s104 = smul.addr %s103, 128
          %s105 = scalar_lea.hbm %s1, %s104
          %s107 = sshll.u32 [#allocation4], 4
          %s108 = int_to_ptr.vmem [resolvable:$true] %s107
          %110 = dma.hbm_to_vmem [thread:$0]  %s105, 512, %s108, [#allocation5]
        $region16: #{tpu_custom_call.1} parent=11 // pred_fallthru
          _
      $region12: #{tpu_custom_call.1} parent=5 // pred_fallthru
        _
      %p111 = scmp.lt.s32.totalorder %s16, 2
      // Predicated region
      $region17: #{tpu_custom_call.1} parent=5 // pred_check
        %p112 = pneg %p111
      $region18: #{tpu_custom_call.1} parent=5 // pred_check_branch
        %114 = sbr.rel (%p112) target = $region20
      $region19: #{tpu_custom_call.1} parent=5 // pred_region
        _
      $region20: #{tpu_custom_call.1} parent=5 // pred_fallthru
        _
      %p115 = scmp.le.s32.totalorder 1, %s16
      %p116 = scmp.lt.s32.totalorder %s16, 3
      %p117 = pnand %p115, %p116
      %p118 = pneg %p117
      // Predicated region
      $region21: #{tpu_custom_call.1} parent=5 // pred_check
        _
      $region22: #{tpu_custom_call.1} parent=5 // pred_check_branch
        %120 = sbr.rel (%p117) target = $region24
      $region23: #{tpu_custom_call.1} parent=5 // pred_region
        %s121 = ssub.s32 %s16, 1
        // Predicated region
        $region25: #{tpu_custom_call.1} parent=23 // pred_check
          %p122 = pneg %p54
        $region26: #{tpu_custom_call.1} parent=23 // pred_check_branch
          %124 = sbr.rel (%p122) target = $region28
        $region27: #{tpu_custom_call.1} parent=23 // pred_region
          %125 = dma.done [#allocation5], 512
        $region28: #{tpu_custom_call.1} parent=23 // pred_fallthru
          _
        %p126 = pneg %p54
        %p127 = pneg %p51
        %p128 = pneg %p82
        %p129 = pneg %p79
        %s130 = sand.u32 %s69, 1
        %s131 = scalar_lea.sflag [#allocation6], %s130
        %s132 = sand.u32 %s69, 1
        %s133 = smul.addr %s132, 32
        %s134 = scalar_lea.vmem [#allocation7], %s133
        %s135 = sadd.s32 %s26, %s25
        %s136 = sld [smem:[#allocation3 + %s26]]
        %v137 = vlaneseq
        %v138 = vshrl.u32 %v137, 7
        %v139 = vlaneseq
        %v140 = vand.u32 %v139, 127
        %v141 = vadd.s32 %v140, 128
        %v142 = vadd.s32 %v140, 256
        %v143 = vadd.s32 %v140, 384
        %v144 = vmul.u32 %v138, 512
        %v145 = vadd.s32 %v144, %v140
        %v146 = vadd.s32 %v144, %v141
        %v147 = vadd.s32 %v144, %v142
        %v148 = vadd.s32 %v144, %v143
        %s149 = smul.u32 %s25, 128
        %s150 = ssub.s32 %s136, %s149
        %s151 = smul.u32 %s150, 32
        %v152 = vstv %s151
        %vm153 = vcmp.lt.s32.totalorder %v145, %v152
        %vm154 = vcmp.lt.s32.totalorder %v146, %v152
        %vm155 = vcmp.lt.s32.totalorder %v147, %v152
        %vm156 = vcmp.lt.s32.totalorder %v148, %v152
        %v157 = vld [vmem:[#allocation4] sm:$0xff]
        %v158 = vld [vmem:[#allocation4 + $0x8] sm:$0xff]
        %v159 = vld [vmem:[#allocation4 + $0x10] sm:$0xff]
        %v160 = vld [vmem:[#allocation4 + $0x18] sm:$0xff]
        %v161 = vsel %vm153, %v157, 0.0
        %v162 = vsel %vm154, %v158, 0.0
        %v163 = vsel %vm155, %v159, 0.0
        %v164 = vsel %vm156, %v160, 0.0
        %165 = vst [vmem:[%s134] sm:$0xff] %v161
        %166 = vst [vmem:[%s134 + $0x8] sm:$0xff] %v162
        %167 = vst [vmem:[%s134 + $0x10] sm:$0xff] %v163
        %168 = vst [vmem:[%s134 + $0x18] sm:$0xff] %v164
        %s169 = sand.u32 %s69, 1
        %s170 = scalar_lea.sflag [#allocation6], %s169
        %s171 = sand.u32 %s69, 1
        %s172 = smul.addr %s171, 32
        %s173 = scalar_lea.vmem [#allocation7], %s172
        // Predicated region
        $region29: #{tpu_custom_call.1} parent=23 // pred_check
          %p174 = pneg %p79
        $region30: #{tpu_custom_call.1} parent=23 // pred_check_branch
          %176 = sbr.rel (%p174) target = $region32
        $region31: #{tpu_custom_call.1} parent=23 // pred_region
          %s177 = sadd.s32 %s26, %s25
          %s179 = ssub.s32 512, 512
          %180 = vsyncadd %s170, %s179
          %s181 = smul.addr %s177, 4
          %s182 = smul.addr %s181, 128
          %s183 = scalar_lea.hbm %s2, %s182
          %s185 = sshll.u32 %s173, 4
          %s186 = int_to_ptr.vmem [resolvable:$true] %s185
          %188 = dma.vmem_to_hbm [thread:$0]  %s186, 512, %s183, %s170
        $region32: #{tpu_custom_call.1} parent=23 // pred_fallthru
          _
      $region24: #{tpu_custom_call.1} parent=5 // pred_fallthru
        _
      %p189 = scmp.le.s32.totalorder 2, %s16
      // Predicated region
      $region33: #{tpu_custom_call.1} parent=5 // pred_check
        %p190 = pneg %p189
      $region34: #{tpu_custom_call.1} parent=5 // pred_check_branch
        %192 = sbr.rel (%p190) target = $region36
      $region35: #{tpu_custom_call.1} parent=5 // pred_region
        %s193 = ssub.s32 %s16, 2
        // Predicated region
        $region37: #{tpu_custom_call.1} parent=35 // pred_check
          %p194 = pneg %p85
        $region38: #{tpu_custom_call.1} parent=35 // pred_check_branch
          %196 = sbr.rel (%p194) target = $region40
        $region39: #{tpu_custom_call.1} parent=35 // pred_region
          %s197 = sand.u32 %s70, 1
          %s198 = scalar_lea.sflag [#allocation6], %s197
          %s199 = sand.u32 %s70, 1
          %s200 = smul.addr %s199, 32
          %s201 = scalar_lea.vmem [#allocation7], %s200
          %202 = dma.done %s198, 512
        $region40: #{tpu_custom_call.1} parent=35 // pred_fallthru
          _
      $region36: #{tpu_custom_call.1} parent=5 // pred_fallthru
        _
    $region6: #{tpu_custom_call.1} parent=1 // loop_footer
      %s20 = sadd.s32 1, %s16
    $region7: #{tpu_custom_call.1} parent=1 // loop_footer_branch
      %15 = sbr.rel target = $region3
    $region8: #{tpu_custom_call.1} parent=1 // loop_exit
      _
    %203 = vsyncpa [#allocation5], 1
    %s204 = scalar_lea.sflag [#allocation5], 1
    %205 = vsyncpa %s204, 1
    %206 = vsyncpa [#allocation6], 1
    %s207 = scalar_lea.sflag [#allocation6], 1
    %208 = vsyncpa %s207, 1

</llo_original>
